<compile_context>
chip_gen: v6e
topology: v6e:2x2x1
jax: 0.10.0
libtpu: 0.0.40
codegen_flags: <defaults>
</compile_context>

<pallas_src>
import jax
import jax.numpy as jnp
from jax.experimental import pallas as pl
from jax.experimental.pallas import tpu as pltpu


def vga_kernel(audio_ref, video_ref,
               w_vid_ref, b_vid_ref,
               w_aud_ref, b_aud_ref,
               w_vg_ref, w_h_ref,
               out_ref):
    a = audio_ref[...]          # (tm, H) in compute dtype (bf16 by default)
    v = video_ref[...]
    cdt = w_vg_ref.dtype        # compute dtype for MXU operands

    # v_t = relu(affine_video(video)); a_t = relu(affine_audio(audio))
    # MXU matmul in compute dtype, f32 accumulation; bias + relu in f32.
    v_t = jnp.maximum(
        jnp.dot(v, w_vid_ref[...], preferred_element_type=jnp.float32)
        + b_vid_ref[...].astype(jnp.float32), 0.0)
    a_t = jnp.maximum(
        jnp.dot(a, w_aud_ref[...], preferred_element_type=jnp.float32)
        + b_aud_ref[...].astype(jnp.float32), 0.0)

    # content_v = affine_v(v_t) + affine_g(a_t)
    # fused as a single K=2H matmul:  [v_t | a_t] @ [[W_v]; [W_g]]
    # (cast to compute dtype BEFORE the lane concat -> half the relayout bytes)
    va = jnp.concatenate([v_t.astype(cdt), a_t.astype(cdt)], axis=-1)
    content_v = jnp.dot(va, w_vg_ref[...], preferred_element_type=jnp.float32)

    # z_t = affine_h(tanh(content_v))   (tanh in f32 on EUP, matmul operand bf16)
    z_t = jnp.dot(jnp.tanh(content_v).astype(cdt), w_h_ref[...],
                  preferred_element_type=jnp.float32)

    # alpha_t = softmax(z_t, dim=-1)  -- kept fully in f32
    z_max = jnp.max(z_t, axis=-1, keepdims=True)
    e = jnp.exp(z_t - z_max)
    alpha = e * pl.reciprocal(jnp.sum(e, axis=-1, keepdims=True), approx=True)

    # audio_t = alpha_t * audio
    out_ref[...] = (alpha * a.astype(jnp.float32)).astype(out_ref.dtype)


def vga_forward(audio, video, params, *, tm=512,
                compute_dtype=jnp.bfloat16, out_dtype=None):
    """audio, video: (B, T, H). Returns (B, T, H) in out_dtype (default: input dtype)."""
    B, T, H = audio.shape
    M = B * T
    if out_dtype is None:
        out_dtype = audio.dtype

    # Row tile: multiple of 8 (sublane), clamped so tiny inputs don't allocate
    # a huge mostly-padding tile.  Default 512 keeps per-step overhead (~0.35us)
    # negligible and feeds the MXU with dense 8x128-aligned tiles.
    tm = max(8, (tm // 8) * 8)
    m_ceil8 = ((M + 7) // 8) * 8
    tm_eff = min(tm, m_ceil8)
    grid_m = pl.cdiv(M, tm_eff)
    M_pad = grid_m * tm_eff

    a2 = audio.reshape(M, H).astype(compute_dtype)
    v2 = video.reshape(M, H).astype(compute_dtype)
    if M_pad != M:
        pad = ((0, M_pad - M), (0, 0))
        a2 = jnp.pad(a2, pad)
        v2 = jnp.pad(v2, pad)

    # Weights in compute dtype; biases stay f32 (added post-accumulation).
    w_vid = params["w_video"].astype(compute_dtype)
    w_aud = params["w_audio"].astype(compute_dtype)
    w_vg = jnp.concatenate([params["w_v"], params["w_g"]], axis=0).astype(compute_dtype)
    w_h = params["w_h"].astype(compute_dtype)
    b_vid = params["b_video"].astype(jnp.float32)
    b_aud = params["b_audio"].astype(jnp.float32)

    rep = lambda i: (0, 0)          # weights: same (resident) block every step
    row = lambda i: (i, 0)          # activations: tile over rows

    out = pl.pallas_call(
        vga_kernel,
        out_shape=jax.ShapeDtypeStruct((M_pad, H), out_dtype),
        grid=(grid_m,),
        in_specs=[
            pl.BlockSpec((tm_eff, H), row),    # audio
            pl.BlockSpec((tm_eff, H), row),    # video
            pl.BlockSpec((H, H), rep),         # affine_video weight (H_in, H_out)
            pl.BlockSpec((1, H), rep),         # affine_video bias
            pl.BlockSpec((H, H), rep),         # affine_audio weight
            pl.BlockSpec((1, H), rep),         # affine_audio bias
            pl.BlockSpec((2 * H, H), rep),     # [W_v; W_g] fused (2H, H)
            pl.BlockSpec((H, H), rep),         # affine_h weight
        ],
        out_specs=pl.BlockSpec((tm_eff, H), row),
        compiler_params=pltpu.CompilerParams(
            dimension_semantics=("parallel",)),
    )(a2, v2, w_vid, b_vid, w_aud, b_aud, w_vg, w_h)

    return out[:M].reshape(B, T, H)


def init_vga_params(key, hidden_size):
    """Deterministic xavier-uniform-style init (shapes follow the PyTorch module)."""
    H = hidden_size
    bound_w = (6.0 / (H + H)) ** 0.5            # xavier_uniform
    bound_b = 1.0 / (H ** 0.5)                  # PyTorch Linear default bias init
    ks = jax.random.split(key, 7)
    u = lambda k, shape, b: jax.random.uniform(k, shape, jnp.float32, -b, b)
    # Weights stored as (H_in, H_out), i.e. already transposed relative to torch.
    return {
        "w_audio": u(ks[0], (H, H), bound_w),
        "b_audio": u(ks[1], (1, H), bound_b),
        "w_video": u(ks[2], (H, H), bound_w),
        "b_video": u(ks[3], (1, H), bound_b),
        "w_v":     u(ks[4], (H, H), bound_w),
        "w_g":     u(ks[5], (H, H), bound_w),
        "w_h":     u(ks[6], (H, H), bound_w),
    }


def vga_reference(audio, video, params):
    """Pure-JAX f32 reference for correctness checking (mirrors the torch module)."""
    v_t = jax.nn.relu(video @ params["w_video"] + params["b_video"][0])
    a_t = jax.nn.relu(audio @ params["w_audio"] + params["b_audio"][0])
    content_v = v_t @ params["w_v"] + a_t @ params["w_g"]
    z_t = jnp.tanh(content_v) @ params["w_h"]
    alpha_t = jax.nn.softmax(z_t, axis=-1)
    return alpha_t * audio


if __name__ == "__main__":
    B, T, H = 2, 8, 128   # hidden_size matches the module default (128)
    key = jax.random.PRNGKey(0)
    k_a, k_v, k_p = jax.random.split(key, 3)

    audio = jax.random.normal(k_a, (B, T, H), jnp.float32)
    video = jax.random.normal(k_v, (B, T, H), jnp.float32)
    params = init_vga_params(k_p, H)

    ref = vga_reference(audio, video, params)

    # 1) Production path: bf16 MXU operands, f32 accumulation / softmax.
    out = jax.block_until_ready(vga_forward(audio, video, params))
    assert out.shape == (B, T, H)
    assert out.dtype == audio.dtype
    assert jnp.allclose(out, ref, atol=1e-2, rtol=1e-1), "bf16 kernel mismatch vs reference"

    # 2) f32 compute path: tight semantic check of the fused/tiled kernel.
    out_f32 = jax.block_until_ready(
        vga_forward(audio, video, params, compute_dtype=jnp.float32))
    assert jnp.allclose(out_f32, ref, atol=1e-3, rtol=1e-3), "f32 kernel mismatch vs reference"

    # 3) Ragged M (B*T not a multiple of the tile): exercises padding + multi-step grid.
    B2, T2 = 3, 7
    k_a2, k_v2 = jax.random.split(jax.random.PRNGKey(1), 2)
    audio2 = jax.random.normal(k_a2, (B2, T2, H), jnp.float32)
    video2 = jax.random.normal(k_v2, (B2, T2, H), jnp.float32)
    ref2 = vga_reference(audio2, video2, params)
    out2 = jax.block_until_ready(
        vga_forward(audio2, video2, params, tm=8, compute_dtype=jnp.float32))
    assert out2.shape == (B2, T2, H)
    assert jnp.allclose(out2, ref2, atol=1e-3, rtol=1e-3), "padded/ragged kernel mismatch"

    print("KERNEL_OK")
</pallas_src>

<mosaic_0001>
module attributes {stable_mosaic.version = 11 : i64} {
  func.func @vga_kernel(%arg0: i32, %arg1: memref<16x128xbf16, #tpu.memory_space<vmem>>, %arg2: memref<16x128xbf16, #tpu.memory_space<vmem>>, %arg3: memref<128x128xbf16, #tpu.memory_space<vmem>>, %arg4: memref<1x128xf32, #tpu.memory_space<vmem>>, %arg5: memref<128x128xbf16, #tpu.memory_space<vmem>>, %arg6: memref<1x128xf32, #tpu.memory_space<vmem>>, %arg7: memref<256x128xbf16, #tpu.memory_space<vmem>>, %arg8: memref<128x128xbf16, #tpu.memory_space<vmem>>, %arg9: memref<16x128xf32, #tpu.memory_space<vmem>>) attributes {dimension_semantics = [#tpu.dimension_semantics<parallel>], iteration_bounds = array<i64: 1>, scalar_prefetch = 0 : i64, scratch_operands = 0 : i64, tpu.core_type = #tpu.core_type<tc>, window_params = [{transform_indices = @transform_0, window_bounds = array<i64: 16, 128>}, {transform_indices = @transform_1, window_bounds = array<i64: 16, 128>}, {pipeline_mode = #tpu.pipeline_mode<synchronous>, transform_indices = @transform_2, window_bounds = array<i64: 128, 128>}, {pipeline_mode = #tpu.pipeline_mode<synchronous>, transform_indices = @transform_3, window_bounds = array<i64: 1, 128>}, {pipeline_mode = #tpu.pipeline_mode<synchronous>, transform_indices = @transform_4, window_bounds = array<i64: 128, 128>}, {pipeline_mode = #tpu.pipeline_mode<synchronous>, transform_indices = @transform_5, window_bounds = array<i64: 1, 128>}, {pipeline_mode = #tpu.pipeline_mode<synchronous>, transform_indices = @transform_6, window_bounds = array<i64: 256, 128>}, {pipeline_mode = #tpu.pipeline_mode<synchronous>, transform_indices = @transform_7, window_bounds = array<i64: 128, 128>}, {transform_indices = @transform_8, window_bounds = array<i64: 16, 128>}]} {
    %c0 = arith.constant 0 : index
    %c0_0 = arith.constant 0 : index
    %0 = vector.load %arg1[%c0, %c0_0] : memref<16x128xbf16, #tpu.memory_space<vmem>>, vector<16x128xbf16>
    %c0_1 = arith.constant 0 : index
    %c0_2 = arith.constant 0 : index
    %1 = vector.load %arg2[%c0_1, %c0_2] : memref<16x128xbf16, #tpu.memory_space<vmem>>, vector<16x128xbf16>
    %c0_3 = arith.constant 0 : index
    %c0_4 = arith.constant 0 : index
    %2 = vector.load %arg3[%c0_3, %c0_4] : memref<128x128xbf16, #tpu.memory_space<vmem>>, vector<128x128xbf16>
    %cst = arith.constant dense<0.000000e+00> : vector<16x128xf32>
    %3 = tpu.matmul %1, %2, %cst {dimension_numbers = #tpu.dot_dimension_numbers<[1], [0], [0], [1], [0, 0, 1, 1], [], []>} : vector<16x128xbf16>, vector<128x128xbf16>, vector<16x128xf32> -> vector<16x128xf32>
    %c0_5 = arith.constant 0 : index
    %c0_6 = arith.constant 0 : index
    %4 = vector.load %arg4[%c0_5, %c0_6] : memref<1x128xf32, #tpu.memory_space<vmem>>, vector<1x128xf32>
    %5 = vector.broadcast %4 : vector<1x128xf32> to vector<16x128xf32>
    %6 = arith.addf %3, %5 : vector<16x128xf32>
    %cst_7 = arith.constant 0.000000e+00 : f32
    %7 = vector.broadcast %cst_7 : f32 to vector<16x128xf32>
    %8 = arith.maximumf %6, %7 : vector<16x128xf32>
    %c0_8 = arith.constant 0 : index
    %c0_9 = arith.constant 0 : index
    %9 = vector.load %arg5[%c0_8, %c0_9] : memref<128x128xbf16, #tpu.memory_space<vmem>>, vector<128x128xbf16>
    %cst_10 = arith.constant dense<0.000000e+00> : vector<16x128xf32>
    %10 = tpu.matmul %0, %9, %cst_10 {dimension_numbers = #tpu.dot_dimension_numbers<[1], [0], [0], [1], [0, 0, 1, 1], [], []>} : vector<16x128xbf16>, vector<128x128xbf16>, vector<16x128xf32> -> vector<16x128xf32>
    %c0_11 = arith.constant 0 : index
    %c0_12 = arith.constant 0 : index
    %11 = vector.load %arg6[%c0_11, %c0_12] : memref<1x128xf32, #tpu.memory_space<vmem>>, vector<1x128xf32>
    %12 = vector.broadcast %11 : vector<1x128xf32> to vector<16x128xf32>
    %13 = arith.addf %10, %12 : vector<16x128xf32>
    %cst_13 = arith.constant 0.000000e+00 : f32
    %14 = vector.broadcast %cst_13 : f32 to vector<16x128xf32>
    %15 = arith.maximumf %13, %14 : vector<16x128xf32>
    %16 = arith.truncf %8 : vector<16x128xf32> to vector<16x128xbf16>
    %17 = arith.truncf %15 : vector<16x128xf32> to vector<16x128xbf16>
    %18 = tpu.concatenate %16, %17 in 1 : vector<16x128xbf16>, vector<16x128xbf16> -> vector<16x256xbf16>
    %c0_14 = arith.constant 0 : index
    %c0_15 = arith.constant 0 : index
    %19 = vector.load %arg7[%c0_14, %c0_15] : memref<256x128xbf16, #tpu.memory_space<vmem>>, vector<256x128xbf16>
    %cst_16 = arith.constant dense<0.000000e+00> : vector<16x128xf32>
    %20 = tpu.matmul %18, %19, %cst_16 {dimension_numbers = #tpu.dot_dimension_numbers<[1], [0], [0], [1], [0, 0, 1, 1], [], []>} : vector<16x256xbf16>, vector<256x128xbf16>, vector<16x128xf32> -> vector<16x128xf32>
    %21 = math.tanh %20 : vector<16x128xf32>
    %22 = arith.truncf %21 : vector<16x128xf32> to vector<16x128xbf16>
    %c0_17 = arith.constant 0 : index
    %c0_18 = arith.constant 0 : index
    %23 = vector.load %arg8[%c0_17, %c0_18] : memref<128x128xbf16, #tpu.memory_space<vmem>>, vector<128x128xbf16>
    %cst_19 = arith.constant dense<0.000000e+00> : vector<16x128xf32>
    %24 = tpu.matmul %22, %23, %cst_19 {dimension_numbers = #tpu.dot_dimension_numbers<[1], [0], [0], [1], [0, 0, 1, 1], [], []>} : vector<16x128xbf16>, vector<128x128xbf16>, vector<16x128xf32> -> vector<16x128xf32>
    %cst_20 = arith.constant dense<0xFF800000> : vector<16xf32>
    %25 = vector.multi_reduction <maximumf>, %24, %cst_20 [1] : vector<16x128xf32> to vector<16xf32>
    %26 = vector.shape_cast %25 : vector<16xf32> to vector<16x1xf32>
    %27 = vector.broadcast %26 : vector<16x1xf32> to vector<16x128xf32>
    %28 = arith.subf %24, %27 : vector<16x128xf32>
    %29 = math.exp %28 : vector<16x128xf32>
    %cst_21 = arith.constant dense<0.000000e+00> : vector<16xf32>
    %30 = vector.multi_reduction <add>, %29, %cst_21 [1] : vector<16x128xf32> to vector<16xf32>
    %31 = vector.shape_cast %30 : vector<16xf32> to vector<16x1xf32>
    %32 = tpu.reciprocal %31 {approx = true} : vector<16x1xf32> -> vector<16x1xf32>
    %33 = vector.broadcast %32 : vector<16x1xf32> to vector<16x128xf32>
    %34 = arith.mulf %29, %33 : vector<16x128xf32>
    %35 = arith.extf %0 : vector<16x128xbf16> to vector<16x128xf32>
    %36 = arith.mulf %34, %35 : vector<16x128xf32>
    %c0_22 = arith.constant 0 : index
    %c0_23 = arith.constant 0 : index
    %37 = vector.load %arg9[%c0_22, %c0_23] : memref<16x128xf32, #tpu.memory_space<vmem>>, vector<16x128xf32>
    tpu.vector_store %arg9[%c0_22, %c0_23], %36 {strides = array<i32>} : memref<16x128xf32, #tpu.memory_space<vmem>>, vector<16x128xf32>,
    return
  }
  func.func @transform_0(%arg0: i32) -> (i32, i32) {
    %c0_i32 = arith.constant 0 : i32
    %c0_i32_0 = arith.constant 0 : i32
    return %arg0, %c0_i32 : i32, i32
  }
  func.func @transform_1(%arg0: i32) -> (i32, i32) {
    %c0_i32 = arith.constant 0 : i32
    %c0_i32_0 = arith.constant 0 : i32
    return %arg0, %c0_i32 : i32, i32
  }
  func.func @transform_2(%arg0: i32) -> (i32, i32) {
    %c0_i32 = arith.constant 0 : i32
    %c0_i32_0 = arith.constant 0 : i32
    %c0_i32_1 = arith.constant 0 : i32
    return %c0_i32, %c0_i32_0 : i32, i32
  }
  func.func @transform_3(%arg0: i32) -> (i32, i32) {
    %c0_i32 = arith.constant 0 : i32
    %c0_i32_0 = arith.constant 0 : i32
    %c0_i32_1 = arith.constant 0 : i32
    return %c0_i32, %c0_i32_0 : i32, i32
  }
  func.func @transform_4(%arg0: i32) -> (i32, i32) {
    %c0_i32 = arith.constant 0 : i32
    %c0_i32_0 = arith.constant 0 : i32
    %c0_i32_1 = arith.constant 0 : i32
    return %c0_i32, %c0_i32_0 : i32, i32
  }
  func.func @transform_5(%arg0: i32) -> (i32, i32) {
    %c0_i32 = arith.constant 0 : i32
    %c0_i32_0 = arith.constant 0 : i32
    %c0_i32_1 = arith.constant 0 : i32
    return %c0_i32, %c0_i32_0 : i32, i32
  }
  func.func @transform_6(%arg0: i32) -> (i32, i32) {
    %c0_i32 = arith.constant 0 : i32
    %c0_i32_0 = arith.constant 0 : i32
    %c0_i32_1 = arith.constant 0 : i32
    return %c0_i32, %c0_i32_0 : i32, i32
  }
  func.func @transform_7(%arg0: i32) -> (i32, i32) {
    %c0_i32 = arith.constant 0 : i32
    %c0_i32_0 = arith.constant 0 : i32
    %c0_i32_1 = arith.constant 0 : i32
    return %c0_i32, %c0_i32_0 : i32, i32
  }
  func.func @transform_8(%arg0: i32) -> (i32, i32) {
    %c0_i32 = arith.constant 0 : i32
    %c0_i32_0 = arith.constant 0 : i32
    return %arg0, %c0_i32 : i32, i32
  }
}

</mosaic_0001>

<llo_original>
// kernel: tpu_custom_call.1
$region0: #{tpu_custom_call.1}
  #allocation0 [shape = 'u32[]', space=smem, size = 0x4, offset = 0x4, fixed_abs, tag = 'smem constant byte address 0x4 - core index']
  #allocation1 [shape = 'u32[144,128]{1,0:T(1,128)}', space=vmem, size = 0x12000, scoped, tag = 'internal scratch']
  %s0 = inlined_call_operand.hbm [shape: bf16[16,128], index: 0, kind: input, shape index: {}]
  %s1 = inlined_call_operand.hbm [shape: bf16[16,128], index: 1, kind: input, shape index: {}]
  %s2 = inlined_call_operand.hbm [shape: bf16[128,128], index: 2, kind: input, shape index: {}]
  %s3 = inlined_call_operand.vmem [shape: f32[1,128], index: 3, kind: input, shape index: {}]
  %s4 = inlined_call_operand.hbm [shape: bf16[128,128], index: 4, kind: input, shape index: {}]
  %s5 = inlined_call_operand.vmem [shape: f32[1,128], index: 5, kind: input, shape index: {}]
  %s6 = inlined_call_operand.hbm [shape: bf16[256,128], index: 6, kind: input, shape index: {}]
  %s7 = inlined_call_operand.hbm [shape: bf16[128,128], index: 7, kind: input, shape index: {}]
  %s8 = inlined_call_operand.hbm [shape: f32[16,128], index: 8, kind: output, shape index: {}]
  %s9 = sld [smem:[#allocation0]]
  $region66: #{tpu_custom_call.1} parent=0
    _
  %s11 = ssub.s32 1, %s9
  %s12 = scalar_select 0, %s11, %s9
  $region1: #{tpu_custom_call.1} parent=0
    #allocation2 [shape = 'u8[4096]{0}', space=vmem, size = 0x1000, scoped, tag = 'input window, operand 0, single buffered']
    #allocation3 [shape = 's32[1]{0}', space=sflag, size = 0x4, scoped, tag = 'scoped memory for tpu_custom_call.1']
    #allocation4 [shape = 's32[1]{0}', space=sflag, size = 0x4, scoped, tag = 'scoped memory for tpu_custom_call.1']
    #allocation5 [shape = 'u8[4096]{0}', space=vmem, size = 0x1000, scoped, tag = 'input window, operand 1, single buffered']
    #allocation6 [shape = 's32[1]{0}', space=sflag, size = 0x4, scoped, tag = 'scoped memory for tpu_custom_call.1']
    #allocation7 [shape = 'u8[32768]{0}', space=vmem, size = 0x8000, scoped, tag = 'input window, operand 2, single buffered']
    #allocation8 [shape = 'u8[32768]{0}', space=vmem, size = 0x8000, scoped, tag = 'input window, operand 4, single buffered']
    #allocation9 [shape = 's32[1]{0}', space=sflag, size = 0x4, scoped, tag = 'scoped memory for tpu_custom_call.1']
    #allocation10 [shape = 'u8[65536]{0}', space=vmem, size = 0x10000, scoped, tag = 'input window, operand 6, single buffered']
    #allocation11 [shape = 'u8[32768]{0}', space=vmem, size = 0x8000, scoped, tag = 'input window, operand 7, single buffered']
    #allocation12 [shape = 's32[1]{0}', space=sflag, size = 0x4, scoped, tag = 'scoped memory for tpu_custom_call.1']
    #allocation13 [shape = 'u8[8192]{0}', space=vmem, size = 0x2000, scoped, tag = 'output window, operand 0, single buffered']
    %13 = vsyncpa [#allocation3], 0
    %14 = vsyncpa [#allocation6], 0
    %15 = vsyncpa [#allocation9], 0
    %16 = vsyncpa [#allocation12], 0
    %17 = vsyncpa [#allocation4], 0
    // Predicated region
    $region2: #{tpu_custom_call.1} parent=1 // pred_check
      _
    $region3: #{tpu_custom_call.1} parent=1 // pred_check_branch
      %19 = sbr.rel (0) target = $region5
    $region4: #{tpu_custom_call.1} parent=1 // pred_region
      %s21 = ssub.s32 128, 128
      %22 = vsyncadd [#allocation3], %s21
      %s23 = sshll.u32 [#allocation2], 4
      %s24 = int_to_ptr.vmem [resolvable:$true] %s23
      %29 = dma.hbm_to_vmem [thread:$0]  %s0, 128, %s24, [#allocation3], 64, 64, 4
    $region5: #{tpu_custom_call.1} parent=1 // pred_fallthru
      _
    // Predicated region
    $region6: #{tpu_custom_call.1} parent=1 // pred_check
      _
    $region7: #{tpu_custom_call.1} parent=1 // pred_check_branch
      %31 = sbr.rel (0) target = $region9
    $region8: #{tpu_custom_call.1} parent=1 // pred_region
      %s33 = ssub.s32 128, 128
      %34 = vsyncadd [#allocation6], %s33
      %s35 = sshll.u32 [#allocation5], 4
      %s36 = int_to_ptr.vmem [resolvable:$true] %s35
      %41 = dma.hbm_to_vmem [thread:$0]  %s1, 128, %s36, [#allocation6], 64, 64, 4
    $region9: #{tpu_custom_call.1} parent=1 // pred_fallthru
      _
    // Predicated region
    $region10: #{tpu_custom_call.1} parent=1 // pred_check
      _
    $region11: #{tpu_custom_call.1} parent=1 // pred_check_branch
      %43 = sbr.rel (0) target = $region13
    $region12: #{tpu_custom_call.1} parent=1 // pred_region
      %s45 = ssub.s32 1024, 1024
      %46 = vsyncadd [#allocation6], %s45
      %s47 = sshll.u32 [#allocation7], 4
      %s48 = int_to_ptr.vmem [resolvable:$true] %s47
      %53 = dma.hbm_to_vmem [thread:$0]  %s2, 1024, %s48, [#allocation6], 64, 64, 4
    $region13: #{tpu_custom_call.1} parent=1 // pred_fallthru
      _
    // Predicated region
    $region14: #{tpu_custom_call.1} parent=1 // pred_check
      _
    $region15: #{tpu_custom_call.1} parent=1 // pred_check_branch
      %55 = sbr.rel (0) target = $region17
    $region16: #{tpu_custom_call.1} parent=1 // pred_region
      _
    $region17: #{tpu_custom_call.1} parent=1 // pred_fallthru
      _
    // Predicated region
    $region18: #{tpu_custom_call.1} parent=1 // pred_check
      _
    $region19: #{tpu_custom_call.1} parent=1 // pred_check_branch
      %57 = sbr.rel (0) target = $region21
    $region20: #{tpu_custom_call.1} parent=1 // pred_region
      %s59 = ssub.s32 1024, 1024
      %60 = vsyncadd [#allocation9], %s59
      %s61 = sshll.u32 [#allocation8], 4
      %s62 = int_to_ptr.vmem [resolvable:$true] %s61
      %67 = dma.hbm_to_vmem [thread:$0]  %s4, 1024, %s62, [#allocation9], 64, 64, 4
    $region21: #{tpu_custom_call.1} parent=1 // pred_fallthru
      _
    // Predicated region
    $region22: #{tpu_custom_call.1} parent=1 // pred_check
      _
    $region23: #{tpu_custom_call.1} parent=1 // pred_check_branch
      %69 = sbr.rel (0) target = $region25
    $region24: #{tpu_custom_call.1} parent=1 // pred_region
      _
    $region25: #{tpu_custom_call.1} parent=1 // pred_fallthru
      _
    // Predicated region
    $region26: #{tpu_custom_call.1} parent=1 // pred_check
      _
    $region27: #{tpu_custom_call.1} parent=1 // pred_check_branch
      %71 = sbr.rel (0) target = $region29
    $region28: #{tpu_custom_call.1} parent=1 // pred_region
      %s73 = ssub.s32 2048, 2048
      %74 = vsyncadd [#allocation9], %s73
      %s75 = sshll.u32 [#allocation10], 4
      %s76 = int_to_ptr.vmem [resolvable:$true] %s75
      %81 = dma.hbm_to_vmem [thread:$0]  %s6, 2048, %s76, [#allocation9], 64, 64, 4
    $region29: #{tpu_custom_call.1} parent=1 // pred_fallthru
      _
    // Predicated region
    $region30: #{tpu_custom_call.1} parent=1 // pred_check
      _
    $region31: #{tpu_custom_call.1} parent=1 // pred_check_branch
      %83 = sbr.rel (0) target = $region33
    $region32: #{tpu_custom_call.1} parent=1 // pred_region
      %s85 = ssub.s32 1024, 1024
      %86 = vsyncadd [#allocation12], %s85
      %s87 = sshll.u32 [#allocation11], 4
      %s88 = int_to_ptr.vmem [resolvable:$true] %s87
      %93 = dma.hbm_to_vmem [thread:$0]  %s7, 1024, %s88, [#allocation12], 64, 64, 4
    $region33: #{tpu_custom_call.1} parent=1 // pred_fallthru
      _
    // Predicated region
    $region34: #{tpu_custom_call.1} parent=1 // pred_check
      _
    $region35: #{tpu_custom_call.1} parent=1 // pred_check_branch
      %95 = sbr.rel (0) target = $region37
    $region36: #{tpu_custom_call.1} parent=1 // pred_region
      %96 = dma.done [#allocation3], 128
    $region37: #{tpu_custom_call.1} parent=1 // pred_fallthru
      _
    // Predicated region
    $region38: #{tpu_custom_call.1} parent=1 // pred_check
      _
    $region39: #{tpu_custom_call.1} parent=1 // pred_check_branch
      %98 = sbr.rel (0) target = $region41
    $region40: #{tpu_custom_call.1} parent=1 // pred_region
      %99 = dma.done [#allocation6], 128
    $region41: #{tpu_custom_call.1} parent=1 // pred_fallthru
      _
    // Predicated region
    $region42: #{tpu_custom_call.1} parent=1 // pred_check
      _
    $region43: #{tpu_custom_call.1} parent=1 // pred_check_branch
      %101 = sbr.rel (0) target = $region45
    $region44: #{tpu_custom_call.1} parent=1 // pred_region
      %102 = dma.done [#allocation6], 1024
    $region45: #{tpu_custom_call.1} parent=1 // pred_fallthru
      _
    // Predicated region
    $region46: #{tpu_custom_call.1} parent=1 // pred_check
      _
    $region47: #{tpu_custom_call.1} parent=1 // pred_check_branch
      %104 = sbr.rel (0) target = $region49
    $region48: #{tpu_custom_call.1} parent=1 // pred_region
      %105 = dma.done [#allocation9], 1024
    $region49: #{tpu_custom_call.1} parent=1 // pred_fallthru
      _
    // Predicated region
    $region50: #{tpu_custom_call.1} parent=1 // pred_check
      _
    $region51: #{tpu_custom_call.1} parent=1 // pred_check_branch
      %107 = sbr.rel (0) target = $region53
    $region52: #{tpu_custom_call.1} parent=1 // pred_region
      %108 = dma.done [#allocation9], 2048
    $region53: #{tpu_custom_call.1} parent=1 // pred_fallthru
      _
    // Predicated region
    $region54: #{tpu_custom_call.1} parent=1 // pred_check
      _
    $region55: #{tpu_custom_call.1} parent=1 // pred_check_branch
      %110 = sbr.rel (0) target = $region57
    $region56: #{tpu_custom_call.1} parent=1 // pred_region
      %111 = dma.done [#allocation12], 1024
    $region57: #{tpu_custom_call.1} parent=1 // pred_fallthru
      _
    %v113 = vld [vmem:[#allocation2] sm:$0xf]
    %v114 = vld [vmem:[#allocation2 + $0x4] sm:$0xf]
    %v115 = vld [vmem:[#allocation5] sm:$0xf]
    %v116 = vld [vmem:[#allocation5 + $0x4] sm:$0xf]
    %v117 = vld [vmem:[#allocation7] sm:$0xf]
    %v118 = vld [vmem:[#allocation7 + $0x4] sm:$0xf]
    %v119 = vld [vmem:[#allocation7 + $0x8] sm:$0xf]
    %v120 = vld [vmem:[#allocation7 + $0xc] sm:$0xf]
    %v121 = vld [vmem:[#allocation7 + $0x10] sm:$0xf]
    %v122 = vld [vmem:[#allocation7 + $0x14] sm:$0xf]
    %v123 = vld [vmem:[#allocation7 + $0x18] sm:$0xf]
    %v124 = vld [vmem:[#allocation7 + $0x1c] sm:$0xf]
    %v125 = vld [vmem:[#allocation7 + $0x20] sm:$0xf]
    %v126 = vld [vmem:[#allocation7 + $0x24] sm:$0xf]
    %v127 = vld [vmem:[#allocation7 + $0x28] sm:$0xf]
    %v128 = vld [vmem:[#allocation7 + $0x2c] sm:$0xf]
    %v129 = vld [vmem:[#allocation7 + $0x30] sm:$0xf]
    %v130 = vld [vmem:[#allocation7 + $0x34] sm:$0xf]
    %v131 = vld [vmem:[#allocation7 + $0x38] sm:$0xf]
    %v132 = vld [vmem:[#allocation7 + $0x3c] sm:$0xf]
    %v133 = vld [vmem:[%s3] sm:$0x1]
    %v135 = vlaneseq
    %v136 = vshrl.u32 %v135, 7
    %v137 = vsub.s32 0, %v136
    %v138 = vrot.slane %v133, %v137
    %v142 = vunpack.c.l.b16 %v115
    %v143 = vunpack.c.l.b16 %v116
    %v144 = vpack.c.b16 %v143, %v142
    %v162 = vunpack.c.l.b16 %v117
    %v163 = vunpack.c.l.b16 %v118
    %v164 = vunpack.c.l.b16 %v119
    %v165 = vunpack.c.l.b16 %v120
    %v166 = vunpack.c.l.b16 %v121
    %v167 = vunpack.c.l.b16 %v122
    %v168 = vunpack.c.l.b16 %v123
    %v169 = vunpack.c.l.b16 %v124
    %v170 = vunpack.c.l.b16 %v125
    %v171 = vunpack.c.l.b16 %v126
    %v172 = vunpack.c.l.b16 %v127
    %v173 = vunpack.c.l.b16 %v128
    %v174 = vunpack.c.l.b16 %v129
    %v175 = vunpack.c.l.b16 %v130
    %v176 = vunpack.c.l.b16 %v131
    %v177 = vunpack.c.l.b16 %v132
    %v178 = vpack.c.b16 %v163, %v162
    %v179 = vpack.c.b16 %v165, %v164
    %v180 = vpack.c.b16 %v167, %v166
    %v181 = vpack.c.b16 %v169, %v168
    %v182 = vpack.c.b16 %v171, %v170
    %v183 = vpack.c.b16 %v173, %v172
    %v184 = vpack.c.b16 %v175, %v174
    %v185 = vpack.c.b16 %v177, %v176
    %194 = vmatprep.subr.bf16.mxu0 0
    %195 = vmatpush1.bf16.msra.mxu0 %v185
    %196 = vmatprep.subr.bf16.mxu0 0
    %197 = vmatpush1.bf16.msra.mxu0 %v184
    %198 = vmatprep.subr.bf16.mxu0 0
    %199 = vmatpush1.bf16.msra.mxu0 %v183
    %200 = vmatprep.subr.bf16.mxu0 0
    %201 = vmatpush1.bf16.msra.mxu0 %v182
    %202 = vmatprep.subr.bf16.mxu0 0
    %203 = vmatpush1.bf16.msra.mxu0 %v181
    %204 = vmatprep.subr.bf16.mxu0 0
    %205 = vmatpush1.bf16.msra.mxu0 %v180
    %206 = vmatprep.subr.bf16.mxu0 0
    %207 = vmatpush1.bf16.msra.mxu0 %v179
    %208 = vmatprep.subr.bf16.mxu0 0
    %209 = vmatpush1.bf16.msra.mxu0 %v178
    %210 = vmatprep.subr.bf16.mxu0 0
    %211 = vmatpush2.bf16.msra.mxu0 0
    %212 = vmatprep.subr.bf16.mxu0 0
    %213 = vmatpush2.bf16.msra.mxu0 0
    %214 = vmatprep.subr.bf16.mxu0 0
    %215 = vmatpush2.bf16.msra.mxu0 0
    %216 = vmatprep.subr.bf16.mxu0 0
    %217 = vmatpush2.bf16.msra.mxu0 0
    %218 = vmatprep.subr.bf16.mxu0 0
    %219 = vmatpush2.bf16.msra.mxu0 0
    %220 = vmatprep.subr.bf16.mxu0 0
    %221 = vmatpush2.bf16.msra.mxu0 0
    %222 = vmatprep.subr.bf16.mxu0 0
    %223 = vmatpush2.bf16.msra.mxu0 0
    %224 = vmatprep.subr.bf16.mxu0 0
    %225 = vmatpush2.bf16.msra.mxu0 0
    %226 = vmatprep.mubr.bf16.mxu0 0
    %227 = vmatmul.mubr.bf16.gmra.mxu0 %v144
    %v228 = vpop.f32.mrf.mxu0
    %v229 = vadd.f32 %v138, %v228
    %v230 = vpop.f32.mrf.mxu0
    %v231 = vpop.f32.mrf.mxu0
    %v232 = vadd.f32 %v138, %v231
    %v233 = vpop.f32.mrf.mxu0
    %234 = vdwg.mxu0
    %v235 = vmax.f32 %v229, 0.0
    %v236 = vmax.f32 %v232, 0.0
    %v237 = vld [vmem:[#allocation8] sm:$0xf]
    %v238 = vld [vmem:[#allocation8 + $0x4] sm:$0xf]
    %v239 = vld [vmem:[#allocation8 + $0x8] sm:$0xf]
    %v240 = vld [vmem:[#allocation8 + $0xc] sm:$0xf]
    %v241 = vld [vmem:[#allocation8 + $0x10] sm:$0xf]
    %v242 = vld [vmem:[#allocation8 + $0x14] sm:$0xf]
    %v243 = vld [vmem:[#allocation8 + $0x18] sm:$0xf]
    %v244 = vld [vmem:[#allocation8 + $0x1c] sm:$0xf]
    %v245 = vld [vmem:[#allocation8 + $0x20] sm:$0xf]
    %v246 = vld [vmem:[#allocation8 + $0x24] sm:$0xf]
    %v247 = vld [vmem:[#allocation8 + $0x28] sm:$0xf]
    %v248 = vld [vmem:[#allocation8 + $0x2c] sm:$0xf]
    %v249 = vld [vmem:[#allocation8 + $0x30] sm:$0xf]
    %v250 = vld [vmem:[#allocation8 + $0x34] sm:$0xf]
    %v251 = vld [vmem:[#allocation8 + $0x38] sm:$0xf]
    %v252 = vld [vmem:[#allocation8 + $0x3c] sm:$0xf]
    %v253 = vld [vmem:[%s5] sm:$0x1]
    %v255 = vlaneseq
    %v256 = vshrl.u32 %v255, 7
    %v257 = vsub.s32 0, %v256
    %v258 = vrot.slane %v253, %v257
    %v262 = vunpack.c.l.b16 %v113
    %v263 = vunpack.c.l.b16 %v114
    %v264 = vpack.c.b16 %v263, %v262
    %v282 = vunpack.c.l.b16 %v237
    %v283 = vunpack.c.l.b16 %v238
    %v284 = vunpack.c.l.b16 %v239
    %v285 = vunpack.c.l.b16 %v240
    %v286 = vunpack.c.l.b16 %v241
    %v287 = vunpack.c.l.b16 %v242
    %v288 = vunpack.c.l.b16 %v243
    %v289 = vunpack.c.l.b16 %v244
    %v290 = vunpack.c.l.b16 %v245
    %v291 = vunpack.c.l.b16 %v246
    %v292 = vunpack.c.l.b16 %v247
    %v293 = vunpack.c.l.b16 %v248
    %v294 = vunpack.c.l.b16 %v249
    %v295 = vunpack.c.l.b16 %v250
    %v296 = vunpack.c.l.b16 %v251
    %v297 = vunpack.c.l.b16 %v252
    %v298 = vpack.c.b16 %v283, %v282
    %v299 = vpack.c.b16 %v285, %v284
    %v300 = vpack.c.b16 %v287, %v286
    %v301 = vpack.c.b16 %v289, %v288
    %v302 = vpack.c.b16 %v291, %v290
    %v303 = vpack.c.b16 %v293, %v292
    %v304 = vpack.c.b16 %v295, %v294
    %v305 = vpack.c.b16 %v297, %v296
    %314 = vmatprep.subr.bf16.mxu0 0
    %315 = vmatpush1.bf16.msra.mxu0 %v305
    %316 = vmatprep.subr.bf16.mxu0 0
    %317 = vmatpush1.bf16.msra.mxu0 %v304
    %318 = vmatprep.subr.bf16.mxu0 0
    %319 = vmatpush1.bf16.msra.mxu0 %v303
    %320 = vmatprep.subr.bf16.mxu0 0
    %321 = vmatpush1.bf16.msra.mxu0 %v302
    %322 = vmatprep.subr.bf16.mxu0 0
    %323 = vmatpush1.bf16.msra.mxu0 %v301
    %324 = vmatprep.subr.bf16.mxu0 0
    %325 = vmatpush1.bf16.msra.mxu0 %v300
    %326 = vmatprep.subr.bf16.mxu0 0
    %327 = vmatpush1.bf16.msra.mxu0 %v299
    %328 = vmatprep.subr.bf16.mxu0 0
    %329 = vmatpush1.bf16.msra.mxu0 %v298
    %330 = vmatprep.subr.bf16.mxu0 0
    %331 = vmatpush2.bf16.msra.mxu0 0
    %332 = vmatprep.subr.bf16.mxu0 0
    %333 = vmatpush2.bf16.msra.mxu0 0
    %334 = vmatprep.subr.bf16.mxu0 0
    %335 = vmatpush2.bf16.msra.mxu0 0
    %336 = vmatprep.subr.bf16.mxu0 0
    %337 = vmatpush2.bf16.msra.mxu0 0
    %338 = vmatprep.subr.bf16.mxu0 0
    %339 = vmatpush2.bf16.msra.mxu0 0
    %340 = vmatprep.subr.bf16.mxu0 0
    %341 = vmatpush2.bf16.msra.mxu0 0
    %342 = vmatprep.subr.bf16.mxu0 0
    %343 = vmatpush2.bf16.msra.mxu0 0
    %344 = vmatprep.subr.bf16.mxu0 0
    %345 = vmatpush2.bf16.msra.mxu0 0
    %346 = vmatprep.mubr.bf16.mxu0 0
    %347 = vmatmul.mubr.bf16.gmra.mxu0 %v264
    %v348 = vpop.f32.mrf.mxu0
    %v349 = vadd.f32 %v258, %v348
    %v350 = vpop.f32.mrf.mxu0
    %v351 = vpop.f32.mrf.mxu0
    %v352 = vadd.f32 %v258, %v351
    %v353 = vpop.f32.mrf.mxu0
    %354 = vdwg.mxu0
    %v355 = vmax.f32 %v349, 0.0
    %v356 = vmax.f32 %v352, 0.0
    %v357 = vpack.c.bf16 %v236, %v235
    %v358 = vpack.c.bf16 %v356, %v355
    %v359 = vld [vmem:[#allocation10] sm:$0xf]
    %v360 = vld [vmem:[#allocation10 + $0x4] sm:$0xf]
    %v361 = vld [vmem:[#allocation10 + $0x8] sm:$0xf]
    %v362 = vld [vmem:[#allocation10 + $0xc] sm:$0xf]
    %v363 = vld [vmem:[#allocation10 + $0x10] sm:$0xf]
    %v364 = vld [vmem:[#allocation10 + $0x14] sm:$0xf]
    %v365 = vld [vmem:[#allocation10 + $0x18] sm:$0xf]
    %v366 = vld [vmem:[#allocation10 + $0x1c] sm:$0xf]
    %v367 = vld [vmem:[#allocation10 + $0x20] sm:$0xf]
    %v368 = vld [vmem:[#allocation10 + $0x24] sm:$0xf]
    %v369 = vld [vmem:[#allocation10 + $0x28] sm:$0xf]
    %v370 = vld [vmem:[#allocation10 + $0x2c] sm:$0xf]
    %v371 = vld [vmem:[#allocation10 + $0x30] sm:$0xf]
    %v372 = vld [vmem:[#allocation10 + $0x34] sm:$0xf]
    %v373 = vld [vmem:[#allocation10 + $0x38] sm:$0xf]
    %v374 = vld [vmem:[#allocation10 + $0x3c] sm:$0xf]
    %v375 = vld [vmem:[#allocation10 + $0x40] sm:$0xf]
    %v376 = vld [vmem:[#allocation10 + $0x44] sm:$0xf]
    %v377 = vld [vmem:[#allocation10 + $0x48] sm:$0xf]
    %v378 = vld [vmem:[#allocation10 + $0x4c] sm:$0xf]
    %v379 = vld [vmem:[#allocation10 + $0x50] sm:$0xf]
    %v380 = vld [vmem:[#allocation10 + $0x54] sm:$0xf]
    %v381 = vld [vmem:[#allocation10 + $0x58] sm:$0xf]
    %v382 = vld [vmem:[#allocation10 + $0x5c] sm:$0xf]
    %v383 = vld [vmem:[#allocation10 + $0x60] sm:$0xf]
    %v384 = vld [vmem:[#allocation10 + $0x64] sm:$0xf]
    %v385 = vld [vmem:[#allocation10 + $0x68] sm:$0xf]
    %v386 = vld [vmem:[#allocation10 + $0x6c] sm:$0xf]
    %v387 = vld [vmem:[#allocation10 + $0x70] sm:$0xf]
    %v388 = vld [vmem:[#allocation10 + $0x74] sm:$0xf]
    %v389 = vld [vmem:[#allocation10 + $0x78] sm:$0xf]
    %v390 = vld [vmem:[#allocation10 + $0x7c] sm:$0xf]
    %v423 = vunpack.c.l.b16 %v359
    %v424 = vunpack.c.l.b16 %v360
    %v425 = vunpack.c.l.b16 %v361
    %v426 = vunpack.c.l.b16 %v362
    %v427 = vunpack.c.l.b16 %v363
    %v428 = vunpack.c.l.b16 %v364
    %v429 = vunpack.c.l.b16 %v365
    %v430 = vunpack.c.l.b16 %v366
    %v431 = vunpack.c.l.b16 %v367
    %v432 = vunpack.c.l.b16 %v368
    %v433 = vunpack.c.l.b16 %v369
    %v434 = vunpack.c.l.b16 %v370
    %v435 = vunpack.c.l.b16 %v371
    %v436 = vunpack.c.l.b16 %v372
    %v437 = vunpack.c.l.b16 %v373
    %v438 = vunpack.c.l.b16 %v374
    %v439 = vunpack.c.l.b16 %v375
    %v440 = vunpack.c.l.b16 %v376
    %v441 = vunpack.c.l.b16 %v377
    %v442 = vunpack.c.l.b16 %v378
    %v443 = vunpack.c.l.b16 %v379
    %v444 = vunpack.c.l.b16 %v380
    %v445 = vunpack.c.l.b16 %v381
    %v446 = vunpack.c.l.b16 %v382
    %v447 = vunpack.c.l.b16 %v383
    %v448 = vunpack.c.l.b16 %v384
    %v449 = vunpack.c.l.b16 %v385
    %v450 = vunpack.c.l.b16 %v386
    %v451 = vunpack.c.l.b16 %v387
    %v452 = vunpack.c.l.b16 %v388
    %v453 = vunpack.c.l.b16 %v389
    %v454 = vunpack.c.l.b16 %v390
    %v455 = vpack.c.b16 %v424, %v423
    %v456 = vpack.c.b16 %v426, %v425
    %v457 = vpack.c.b16 %v428, %v427
    %v458 = vpack.c.b16 %v430, %v429
    %v459 = vpack.c.b16 %v432, %v431
    %v460 = vpack.c.b16 %v434, %v433
    %v461 = vpack.c.b16 %v436, %v435
    %v462 = vpack.c.b16 %v438, %v437
    %v463 = vpack.c.b16 %v440, %v439
    %v464 = vpack.c.b16 %v442, %v441
    %v465 = vpack.c.b16 %v444, %v443
    %v466 = vpack.c.b16 %v446, %v445
    %v467 = vpack.c.b16 %v448, %v447
    %v468 = vpack.c.b16 %v450, %v449
    %v469 = vpack.c.b16 %v452, %v451
    %v470 = vpack.c.b16 %v454, %v453
    %487 = vmatprep.subr.bf16.mxu0 0
    %488 = vmatpush1.bf16.msra.mxu0 %v462
    %489 = vmatprep.subr.bf16.mxu0 0
    %490 = vmatpush1.bf16.msra.mxu0 %v461
    %491 = vmatprep.subr.bf16.mxu0 0
    %492 = vmatpush1.bf16.msra.mxu0 %v460
    %493 = vmatprep.subr.bf16.mxu0 0
    %494 = vmatpush1.bf16.msra.mxu0 %v459
    %495 = vmatprep.subr.bf16.mxu0 0
    %496 = vmatpush1.bf16.msra.mxu0 %v458
    %497 = vmatprep.subr.bf16.mxu0 0
    %498 = vmatpush1.bf16.msra.mxu0 %v457
    %499 = vmatprep.subr.bf16.mxu0 0
    %500 = vmatpush1.bf16.msra.mxu0 %v456
    %501 = vmatprep.subr.bf16.mxu0 0
    %502 = vmatpush1.bf16.msra.mxu0 %v455
    %503 = vmatprep.subr.bf16.mxu0 0
    %504 = vmatpush2.bf16.msra.mxu0 %v470
    %505 = vmatprep.subr.bf16.mxu0 0
    %506 = vmatpush2.bf16.msra.mxu0 %v469
    %507 = vmatprep.subr.bf16.mxu0 0
    %508 = vmatpush2.bf16.msra.mxu0 %v468
    %509 = vmatprep.subr.bf16.mxu0 0
    %510 = vmatpush2.bf16.msra.mxu0 %v467
    %511 = vmatprep.subr.bf16.mxu0 0
    %512 = vmatpush2.bf16.msra.mxu0 %v466
    %513 = vmatprep.subr.bf16.mxu0 0
    %514 = vmatpush2.bf16.msra.mxu0 %v465
    %515 = vmatprep.subr.bf16.mxu0 0
    %516 = vmatpush2.bf16.msra.mxu0 %v464
    %517 = vmatprep.subr.bf16.mxu0 0
    %518 = vmatpush2.bf16.msra.mxu0 %v463
    %519 = vmatprep.mubr.bf16.mxu0 %v358
    %520 = vmatmul.mubr.bf16.gmra.mxu0 %v357
    %v521 = vpop.f32.mrf.mxu0
    %v522 = vadd.f32 0.0, %v521
    %v523 = vpop.f32.mrf.mxu0
    %v524 = vpop.f32.mrf.mxu0
    %v525 = vadd.f32 0.0, %v524
    %v526 = vpop.f32.mrf.mxu0
    %527 = vdwg.mxu0
    %v528 = vtanh.pop %v522
    %v529 = vtanh.pop %v525
    %v530 = vpack.c.bf16 %v529, %v528
    %v531 = vld [vmem:[#allocation11] sm:$0xf]
    %v532 = vld [vmem:[#allocation11 + $0x4] sm:$0xf]
    %v533 = vld [vmem:[#allocation11 + $0x8] sm:$0xf]
    %v534 = vld [vmem:[#allocation11 + $0xc] sm:$0xf]
    %v535 = vld [vmem:[#allocation11 + $0x10] sm:$0xf]
    %v536 = vld [vmem:[#allocation11 + $0x14] sm:$0xf]
    %v537 = vld [vmem:[#allocation11 + $0x18] sm:$0xf]
    %v538 = vld [vmem:[#allocation11 + $0x1c] sm:$0xf]
    %v539 = vld [vmem:[#allocation11 + $0x20] sm:$0xf]
    %v540 = vld [vmem:[#allocation11 + $0x24] sm:$0xf]
    %v541 = vld [vmem:[#allocation11 + $0x28] sm:$0xf]
    %v542 = vld [vmem:[#allocation11 + $0x2c] sm:$0xf]
    %v543 = vld [vmem:[#allocation11 + $0x30] sm:$0xf]
    %v544 = vld [vmem:[#allocation11 + $0x34] sm:$0xf]
    %v545 = vld [vmem:[#allocation11 + $0x38] sm:$0xf]
    %v546 = vld [vmem:[#allocation11 + $0x3c] sm:$0xf]
    %v563 = vunpack.c.l.b16 %v531
    %v564 = vunpack.c.l.b16 %v532
    %v565 = vunpack.c.l.b16 %v533
    %v566 = vunpack.c.l.b16 %v534
    %v567 = vunpack.c.l.b16 %v535
    %v568 = vunpack.c.l.b16 %v536
    %v569 = vunpack.c.l.b16 %v537
    %v570 = vunpack.c.l.b16 %v538
    %v571 = vunpack.c.l.b16 %v539
    %v572 = vunpack.c.l.b16 %v540
    %v573 = vunpack.c.l.b16 %v541
    %v574 = vunpack.c.l.b16 %v542
    %v575 = vunpack.c.l.b16 %v543
    %v576 = vunpack.c.l.b16 %v544
    %v577 = vunpack.c.l.b16 %v545
    %v578 = vunpack.c.l.b16 %v546
    %v579 = vpack.c.b16 %v564, %v563
    %v580 = vpack.c.b16 %v566, %v565
    %v581 = vpack.c.b16 %v568, %v567
    %v582 = vpack.c.b16 %v570, %v569
    %v583 = vpack.c.b16 %v572, %v571
    %v584 = vpack.c.b16 %v574, %v573
    %v585 = vpack.c.b16 %v576, %v575
    %v586 = vpack.c.b16 %v578, %v577
    %595 = vmatprep.subr.bf16.mxu0 0
    %596 = vmatpush1.bf16.msra.mxu0 %v586
    %597 = vmatprep.subr.bf16.mxu0 0
    %598 = vmatpush1.bf16.msra.mxu0 %v585
    %599 = vmatprep.subr.bf16.mxu0 0
    %600 = vmatpush1.bf16.msra.mxu0 %v584
    %601 = vmatprep.subr.bf16.mxu0 0
    %602 = vmatpush1.bf16.msra.mxu0 %v583
    %603 = vmatprep.subr.bf16.mxu0 0
    %604 = vmatpush1.bf16.msra.mxu0 %v582
    %605 = vmatprep.subr.bf16.mxu0 0
    %606 = vmatpush1.bf16.msra.mxu0 %v581
    %607 = vmatprep.subr.bf16.mxu0 0
    %608 = vmatpush1.bf16.msra.mxu0 %v580
    %609 = vmatprep.subr.bf16.mxu0 0
    %610 = vmatpush1.bf16.msra.mxu0 %v579
    %611 = vmatprep.subr.bf16.mxu0 0
    %612 = vmatpush2.bf16.msra.mxu0 0
    %613 = vmatprep.subr.bf16.mxu0 0
    %614 = vmatpush2.bf16.msra.mxu0 0
    %615 = vmatprep.subr.bf16.mxu0 0
    %616 = vmatpush2.bf16.msra.mxu0 0
    %617 = vmatprep.subr.bf16.mxu0 0
    %618 = vmatpush2.bf16.msra.mxu0 0
    %619 = vmatprep.subr.bf16.mxu0 0
    %620 = vmatpush2.bf16.msra.mxu0 0
    %621 = vmatprep.subr.bf16.mxu0 0
    %622 = vmatpush2.bf16.msra.mxu0 0
    %623 = vmatprep.subr.bf16.mxu0 0
    %624 = vmatpush2.bf16.msra.mxu0 0
    %625 = vmatprep.subr.bf16.mxu0 0
    %626 = vmatpush2.bf16.msra.mxu0 0
    %627 = vmatprep.mubr.bf16.mxu0 0
    %628 = vmatmul.mubr.bf16.gmra.mxu0 %v530
    %v629 = vpop.f32.mrf.mxu0
    %v630 = vadd.f32 0.0, %v629
    %v631 = vpop.f32.mrf.mxu0
    %v632 = vpop.f32.mrf.mxu0
    %v633 = vadd.f32 0.0, %v632
    %v634 = vpop.f32.mrf.mxu0
    %635 = vdwg.mxu0
    %636 = vmax.xlane.f32.xlu0 %v630
    %v637 = vpop.xlane.xlu0 %636
    %638 = vmax.xlane.f32.xlu0 %v633
    %v639 = vpop.xlane.xlu0 %638
    %v640 = vsub.f32 %v630, %v637
    %v641 = vsub.f32 %v633, %v639
    %v642 = vmul.f32 %v640, 1.442695
    %v643 = vpow.pop %v642
    %v644 = vmul.f32 %v641, 1.442695
    %v645 = vpow.pop %v644
    %646 = vadd.xlane.f32.xlu0 %v643
    %v647 = vpop.xlane.xlu0 %646
    %648 = vadd.xlane.f32.xlu0 %v645
    %v649 = vpop.xlane.xlu0 %648
    %v650 = vrcp.pop %v647
    %v651 = vrcp.pop %v649
    %v652 = vmul.f32 %v643, %v650
    %v653 = vmul.f32 %v645, %v651
    %v654 = vunpack.c.l.bf16 %v113
    %v655 = vunpack.c.l.bf16 %v114
    %v656 = vmul.f32 %v652, %v654
    %v657 = vmul.f32 %v653, %v655
    %658 = vst [vmem:[#allocation13] sm:$0xff] %v656
    %659 = vst [vmem:[#allocation13 + $0x8] sm:$0xff] %v657
    // Predicated region
    $region58: #{tpu_custom_call.1} parent=1 // pred_check
      _
    $region59: #{tpu_custom_call.1} parent=1 // pred_check_branch
      %661 = sbr.rel (0) target = $region61
    $region60: #{tpu_custom_call.1} parent=1 // pred_region
      %s663 = ssub.s32 256, 256
      %664 = vsyncadd [#allocation4], %s663
      %s665 = sshll.u32 [#allocation13], 4
      %s666 = int_to_ptr.vmem [resolvable:$true] %s665
      %671 = dma.vmem_to_hbm [thread:$0]  %s666, 256, %s8, [#allocation4], 128, 128, 8
    $region61: #{tpu_custom_call.1} parent=1 // pred_fallthru
      _
    // Predicated region
    $region62: #{tpu_custom_call.1} parent=1 // pred_check
      _
    $region63: #{tpu_custom_call.1} parent=1 // pred_check_branch
      %673 = sbr.rel (0) target = $region65
    $region64: #{tpu_custom_call.1} parent=1 // pred_region
      %674 = dma.done [#allocation4], 256
    $region65: #{tpu_custom_call.1} parent=1 // pred_fallthru
      _
    %675 = vsyncpa [#allocation3], 1
    %676 = vsyncpa [#allocation6], 1
    %677 = vsyncpa [#allocation9], 1
    %678 = vsyncpa [#allocation12], 1
    %679 = vsyncpa [#allocation4], 1

</llo_original>
